<compile_context>
chip_gen: v7x
topology: tpu7x:2x2x1
jax: 0.10.0
libtpu: 0.0.40
codegen_flags: <defaults>
</compile_context>

<pallas_src>
import functools

import jax
import jax.numpy as jnp
import numpy as np
from jax.experimental import pallas as pl
from jax.experimental.pallas import tpu as pltpu


def _round_up(x, m):
    return ((x + m - 1) // m) * m


def _cdiv(a, b):
    return -(-a // b)


def _nms_mask_kernel(rel_ref, rep_ref, rep_up_ref, rep_dn_ref, mask_ref, *,
                     rel_thr, rep_thr, true_h):
    """NMS maxima mask for one (TH, W) row tile of the (H, W) plane."""
    i = pl.program_id(0)
    n = pl.num_programs(0)

    rep = rep_ref[...]                       # (TH, W), input dtype
    rel = rel_ref[...]                       # (TH, W)
    th, w = rep.shape
    dtype = rep.dtype
    neg_inf = jnp.asarray(-jnp.inf, dtype)

    # Rows past the true image height (ragged last tile) are unspecified data;
    # force them to -inf so they act exactly like MaxPool2d's padding and can
    # never pass the rep_thr test.
    grow = i * th + jax.lax.broadcasted_iota(jnp.int32, rep.shape, 0)
    rep = jnp.where(grow < true_h, rep, neg_inf)

    def hmax3(x):
        # Horizontal (lane) 3-max; wrapped edge columns behave like -inf pad.
        wd = x.shape[1]
        col = jax.lax.broadcasted_iota(jnp.int32, x.shape, 1)
        left = jnp.where(col == 0, neg_inf, pltpu.roll(x, shift=1, axis=1))
        # shift of -1 expressed as wd - 1 (pltpu.roll requires shift >= 0).
        right = jnp.where(col == wd - 1, neg_inf,
                          pltpu.roll(x, shift=wd - 1, axis=1))
        return jnp.maximum(x, jnp.maximum(left, right))

    h = hmax3(rep)                           # (TH, W)
    # Only the single needed halo row is touched before any compute.
    h_top = hmax3(rep_up_ref[7:8, :])        # (1, W) row directly above tile
    h_bot = hmax3(rep_dn_ref[0:1, :])        # (1, W) row directly below tile
    # At the image top/bottom there is no neighbour -> -inf (MaxPool2d pad).
    h_top = jnp.where(i > 0, h_top, neg_inf)
    h_bot = jnp.where(i < n - 1, h_bot, neg_inf)

    # Vertical (sublane) 3-max; wrapped edge rows replaced by halo rows.
    row = jax.lax.broadcasted_iota(jnp.int32, h.shape, 0)
    up = jnp.where(row == 0, h_top, pltpu.roll(h, shift=1, axis=0))
    dn = jnp.where(row == th - 1, h_bot, pltpu.roll(h, shift=th - 1, axis=0))
    max3x3 = jnp.maximum(h, jnp.maximum(up, dn))

    maxima = rep == max3x3
    maxima &= rep >= jnp.asarray(rep_thr, dtype)
    maxima &= rel >= jnp.asarray(rel_thr, rel.dtype)
    mask_ref[...] = maxima.astype(jnp.int8)


def _nms_mask(rel2d, rep2d, rel_thr, rep_thr, row_tile=256):
    """Compute the (H, W) int8 NMS mask with a row-tiled Pallas kernel."""
    H, W = rep2d.shape
    assert rel2d.shape == (H, W)

    # ---- Row-tile selection (no wrapper padding; lane dim = full width) ----
    # Budget ~1M elements per tile so double-buffered inputs + temporaries fit
    # comfortably inside every generation's scoped VMEM; multiple of 32 (int8
    # output sublane tiling) whenever the tile is not the whole image.
    budget_rows = max(32, min(row_tile, (1 << 20) // max(W, 1)))
    if H <= budget_rows:
        TH = H                              # single tile == full array dim
    else:
        TH = max(32, (budget_rows // 32) * 32)
    n_tiles = _cdiv(H, TH)
    # Prefer an even tile count (v7x shards the parallel axis over 2 TCs).
    if n_tiles > 1 and n_tiles % 2:
        th2 = _round_up(_cdiv(H, n_tiles + 1), 32)
        if th2 >= 32 and _cdiv(H, th2) % 2 == 0:
            TH, n_tiles = th2, _cdiv(H, th2)

    sub8 = max(TH // 8, 1)                  # 8-row blocks per tile (halo maps)
    last_blk8 = max(_cdiv(H, 8) - 1, 0)     # last valid 8-row block index

    # Explicit VMEM budget: footprint estimate with headroom, capped at 64 MiB
    # (v7x physical); never below the 32 MiB default of v6e/v7x.
    itemsize = jnp.dtype(rep2d.dtype).itemsize
    est = 2 * 2 * TH * W * itemsize         # rel + rep tiles, double-buffered
    est += 2 * 2 * 8 * W * itemsize         # two 8-row halos, double-buffered
    est += 2 * TH * W                       # int8 output, double-buffered
    vmem_limit = int(min(64 * 1024 * 1024, max(32 * 1024 * 1024, 3 * est)))

    kernel = functools.partial(_nms_mask_kernel, rel_thr=rel_thr,
                               rep_thr=rep_thr, true_h=H)
    mask = pl.pallas_call(
        kernel,
        out_shape=jax.ShapeDtypeStruct((H, W), jnp.int8),
        grid=(n_tiles,),
        in_specs=[
            pl.BlockSpec((TH, W), lambda i: (i, 0)),                 # reliability
            pl.BlockSpec((TH, W), lambda i: (i, 0)),                 # repeatability
            pl.BlockSpec((8, W),                                     # 8 rows above
                         lambda i: (jnp.maximum(i * sub8 - 1, 0), 0)),
            pl.BlockSpec((8, W),                                     # 8 rows below
                         lambda i: (jnp.minimum((i + 1) * sub8, last_blk8), 0)),
        ],
        out_specs=pl.BlockSpec((TH, W), lambda i: (i, 0)),
        compiler_params=pltpu.CompilerParams(
            dimension_semantics=("parallel",),
            vmem_limit_bytes=vmem_limit,
        ),
    )(rel2d, rep2d, rep2d, rep2d)
    return mask


def non_max_suppression(reliability, repeatability, rel_thr=0.7, rep_thr=0.7,
                        row_tile=256):
    """JAX/Pallas equivalent of NonMaxSuppression.forward.

    reliability, repeatability: NCHW arrays of shape (1, 1, H, W) (f32 or bf16).
    Returns (coords, mask): coords is a (2, N) int32 numpy array of (y, x)
    coordinates matching `maxima.nonzero().t()[2:4]`; mask is the (H, W)
    int8 maxima mask (device array).
    """
    assert len(reliability) == len(repeatability) == 1  # batch dim must be 1

    rel2d = reliability[0, 0]
    rep2d = repeatability[0, 0]

    mask = _nms_mask(rel2d, rep2d, rel_thr, rep_thr, row_tile=row_tile)

    # TODO(synk): nonzero() has a data-dependent output shape; no static-shape
    # Pallas equivalent, so coordinate extraction runs on host (int8 mask keeps
    # the D2H transfer small, coords stay in numpy to avoid a re-upload).
    ys, xs = np.nonzero(np.asarray(mask))
    coords = np.stack([ys.astype(np.int32), xs.astype(np.int32)], axis=0)
    return coords, mask


def _reference_mask(rel, rep, rel_thr, rep_thr):
    """Pure-numpy reference of the PyTorch forward (for verification)."""
    rep = np.asarray(rep, np.float32)
    rel = np.asarray(rel, np.float32)
    H, W = rep.shape
    p = np.full((H + 2, W + 2), -np.inf, np.float32)
    p[1:-1, 1:-1] = rep
    mx = np.full((H, W), -np.inf, np.float32)
    for dy in range(3):
        for dx in range(3):
            mx = np.maximum(mx, p[dy:dy + H, dx:dx + W])
    return (rep == mx) & (rep >= rep_thr) & (rel >= rel_thr)


if __name__ == "__main__":
    key = jax.random.PRNGKey(0)
    k_rel, k_rep = jax.random.split(key)

    # Small NCHW inputs (batch=1, channel=1) consistent with the module.
    # W is deliberately not a multiple of 128 and H spans several row tiles
    # (row_tile=32) so the unpadded lane path and the inter-tile halo paths
    # are both exercised.
    H, W = 96, 80
    reliability = jax.random.uniform(k_rel, (1, 1, H, W), dtype=jnp.float32)
    repeatability = jax.random.uniform(k_rep, (1, 1, H, W), dtype=jnp.float32)

    coords, mask = non_max_suppression(reliability, repeatability,
                                       rel_thr=0.7, rep_thr=0.7, row_tile=32)
    mask = jax.block_until_ready(mask)

    ref = _reference_mask(np.asarray(reliability[0, 0]),
                          np.asarray(repeatability[0, 0]), 0.7, 0.7)
    if not np.array_equal(np.asarray(mask).astype(bool), ref):
        raise AssertionError("Pallas NMS mask does not match reference")
    ref_ys, ref_xs = np.nonzero(ref)
    if not (np.array_equal(coords[0], ref_ys) and np.array_equal(coords[1], ref_xs)):
        raise AssertionError("Pallas NMS coords do not match reference")

    print("KERNEL_OK")
</pallas_src>

<mosaic_0001>
module attributes {stable_mosaic.version = 11 : i64} {
  func.func @_nms_mask_kernel(%arg0: i32, %arg1: memref<32x80xf32, #tpu.memory_space<vmem>>, %arg2: memref<32x80xf32, #tpu.memory_space<vmem>>, %arg3: memref<8x80xf32, #tpu.memory_space<vmem>>, %arg4: memref<8x80xf32, #tpu.memory_space<vmem>>, %arg5: memref<32x80xi8, #tpu.memory_space<vmem>>) attributes {dimension_semantics = [#tpu.dimension_semantics<parallel>], iteration_bounds = array<i64: 3>, scalar_prefetch = 0 : i64, scratch_operands = 0 : i64, tpu.core_type = #tpu.core_type<tc>, window_params = [{transform_indices = @transform_0, window_bounds = array<i64: 32, 80>}, {transform_indices = @transform_1, window_bounds = array<i64: 32, 80>}, {transform_indices = @transform_2, window_bounds = array<i64: 8, 80>}, {transform_indices = @transform_3, window_bounds = array<i64: 8, 80>}, {transform_indices = @transform_4, window_bounds = array<i64: 32, 80>}]} {
    %c0 = arith.constant 0 : index
    %c0_0 = arith.constant 0 : index
    %0 = vector.load %arg2[%c0, %c0_0] : memref<32x80xf32, #tpu.memory_space<vmem>>, vector<32x80xf32>
    %c0_1 = arith.constant 0 : index
    %c0_2 = arith.constant 0 : index
    %1 = vector.load %arg1[%c0_1, %c0_2] : memref<32x80xf32, #tpu.memory_space<vmem>>, vector<32x80xf32>
    %c32_i32 = arith.constant 32 : i32
    %2 = arith.muli %arg0, %c32_i32 : i32
    %3 = tpu.iota {dimensions = array<i32: 0>} : vector<32x80xi32>
    %4 = vector.broadcast %2 : i32 to vector<32x80xi32>
    %5 = arith.addi %4, %3 : vector<32x80xi32>
    %c96_i32 = arith.constant 96 : i32
    %6 = vector.broadcast %c96_i32 : i32 to vector<32x80xi32>
    %7 = arith.cmpi slt, %5, %6 : vector<32x80xi32>
    %cst = arith.constant 0xFF800000 : f32
    %8 = vector.broadcast %cst : f32 to vector<32x80xf32>
    %9 = arith.select %7, %0, %8 : vector<32x80xi1>, vector<32x80xf32>
    %10 = tpu.iota {dimensions = array<i32: 1>} : vector<32x80xi32>
    %c0_i32 = arith.constant 0 : i32
    %11 = vector.broadcast %c0_i32 : i32 to vector<32x80xi32>
    %12 = arith.cmpi eq, %10, %11 : vector<32x80xi32>
    %c1_i32 = arith.constant 1 : i32
    %13 = tpu.dynamic_rotate %9 by %c1_i32 dim 1 : vector<32x80xf32>, i32 -> vector<32x80xf32>
    %cst_3 = arith.constant 0xFF800000 : f32
    %14 = vector.broadcast %cst_3 : f32 to vector<32x80xf32>
    %15 = arith.select %12, %14, %13 : vector<32x80xi1>, vector<32x80xf32>
    %c79_i32 = arith.constant 79 : i32
    %16 = vector.broadcast %c79_i32 : i32 to vector<32x80xi32>
    %17 = arith.cmpi eq, %10, %16 : vector<32x80xi32>
    %c79_i32_4 = arith.constant 79 : i32
    %18 = tpu.dynamic_rotate %9 by %c79_i32_4 dim 1 : vector<32x80xf32>, i32 -> vector<32x80xf32>
    %cst_5 = arith.constant 0xFF800000 : f32
    %19 = vector.broadcast %cst_5 : f32 to vector<32x80xf32>
    %20 = arith.select %17, %19, %18 : vector<32x80xi1>, vector<32x80xf32>
    %21 = arith.maximumf %15, %20 : vector<32x80xf32>
    %22 = arith.maximumf %9, %21 : vector<32x80xf32>
    %c7 = arith.constant 7 : index
    %c0_6 = arith.constant 0 : index
    %23 = vector.load %arg3[%c7, %c0_6] : memref<8x80xf32, #tpu.memory_space<vmem>>, vector<1x80xf32>
    %24 = tpu.iota {dimensions = array<i32: 1>} : vector<1x80xi32>
    %c0_i32_7 = arith.constant 0 : i32
    %25 = vector.broadcast %c0_i32_7 : i32 to vector<1x80xi32>
    %26 = arith.cmpi eq, %24, %25 : vector<1x80xi32>
    %c1_i32_8 = arith.constant 1 : i32
    %27 = tpu.dynamic_rotate %23 by %c1_i32_8 dim 1 : vector<1x80xf32>, i32 -> vector<1x80xf32>
    %cst_9 = arith.constant 0xFF800000 : f32
    %28 = vector.broadcast %cst_9 : f32 to vector<1x80xf32>
    %29 = arith.select %26, %28, %27 : vector<1x80xi1>, vector<1x80xf32>
    %c79_i32_10 = arith.constant 79 : i32
    %30 = vector.broadcast %c79_i32_10 : i32 to vector<1x80xi32>
    %31 = arith.cmpi eq, %24, %30 : vector<1x80xi32>
    %c79_i32_11 = arith.constant 79 : i32
    %32 = tpu.dynamic_rotate %23 by %c79_i32_11 dim 1 : vector<1x80xf32>, i32 -> vector<1x80xf32>
    %cst_12 = arith.constant 0xFF800000 : f32
    %33 = vector.broadcast %cst_12 : f32 to vector<1x80xf32>
    %34 = arith.select %31, %33, %32 : vector<1x80xi1>, vector<1x80xf32>
    %35 = arith.maximumf %29, %34 : vector<1x80xf32>
    %36 = arith.maximumf %23, %35 : vector<1x80xf32>
    %c0_13 = arith.constant 0 : index
    %c0_14 = arith.constant 0 : index
    %37 = vector.load %arg4[%c0_13, %c0_14] : memref<8x80xf32, #tpu.memory_space<vmem>>, vector<1x80xf32>
    %38 = tpu.iota {dimensions = array<i32: 1>} : vector<1x80xi32>
    %c0_i32_15 = arith.constant 0 : i32
    %39 = vector.broadcast %c0_i32_15 : i32 to vector<1x80xi32>
    %40 = arith.cmpi eq, %38, %39 : vector<1x80xi32>
    %c1_i32_16 = arith.constant 1 : i32
    %41 = tpu.dynamic_rotate %37 by %c1_i32_16 dim 1 : vector<1x80xf32>, i32 -> vector<1x80xf32>
    %cst_17 = arith.constant 0xFF800000 : f32
    %42 = vector.broadcast %cst_17 : f32 to vector<1x80xf32>
    %43 = arith.select %40, %42, %41 : vector<1x80xi1>, vector<1x80xf32>
    %c79_i32_18 = arith.constant 79 : i32
    %44 = vector.broadcast %c79_i32_18 : i32 to vector<1x80xi32>
    %45 = arith.cmpi eq, %38, %44 : vector<1x80xi32>
    %c79_i32_19 = arith.constant 79 : i32
    %46 = tpu.dynamic_rotate %37 by %c79_i32_19 dim 1 : vector<1x80xf32>, i32 -> vector<1x80xf32>
    %cst_20 = arith.constant 0xFF800000 : f32
    %47 = vector.broadcast %cst_20 : f32 to vector<1x80xf32>
    %48 = arith.select %45, %47, %46 : vector<1x80xi1>, vector<1x80xf32>
    %49 = arith.maximumf %43, %48 : vector<1x80xf32>
    %50 = arith.maximumf %37, %49 : vector<1x80xf32>
    %c0_i32_21 = arith.constant 0 : i32
    %51 = arith.cmpi sgt, %arg0, %c0_i32_21 : i32
    %cst_22 = arith.constant 0xFF800000 : f32
    %52 = vector.broadcast %cst_22 : f32 to vector<1x80xf32>
    %53 = arith.select %51, %36, %52 : vector<1x80xf32>
    %c2_i32 = arith.constant 2 : i32
    %54 = arith.cmpi slt, %arg0, %c2_i32 : i32
    %cst_23 = arith.constant 0xFF800000 : f32
    %55 = vector.broadcast %cst_23 : f32 to vector<1x80xf32>
    %56 = arith.select %54, %50, %55 : vector<1x80xf32>
    %57 = tpu.iota {dimensions = array<i32: 0>} : vector<32x80xi32>
    %c0_i32_24 = arith.constant 0 : i32
    %58 = vector.broadcast %c0_i32_24 : i32 to vector<32x80xi32>
    %59 = arith.cmpi eq, %57, %58 : vector<32x80xi32>
    %c1_i32_25 = arith.constant 1 : i32
    %60 = tpu.dynamic_rotate %22 by %c1_i32_25 dim 0 : vector<32x80xf32>, i32 -> vector<32x80xf32>
    %61 = vector.shape_cast %53 : vector<1x80xf32> to vector<1x80xf32>
    %62 = vector.broadcast %61 : vector<1x80xf32> to vector<32x80xf32>
    %63 = arith.select %59, %62, %60 : vector<32x80xi1>, vector<32x80xf32>
    %c31_i32 = arith.constant 31 : i32
    %64 = vector.broadcast %c31_i32 : i32 to vector<32x80xi32>
    %65 = arith.cmpi eq, %57, %64 : vector<32x80xi32>
    %c31_i32_26 = arith.constant 31 : i32
    %66 = tpu.dynamic_rotate %22 by %c31_i32_26 dim 0 : vector<32x80xf32>, i32 -> vector<32x80xf32>
    %67 = vector.shape_cast %56 : vector<1x80xf32> to vector<1x80xf32>
    %68 = vector.broadcast %67 : vector<1x80xf32> to vector<32x80xf32>
    %69 = arith.select %65, %68, %66 : vector<32x80xi1>, vector<32x80xf32>
    %70 = arith.maximumf %63, %69 : vector<32x80xf32>
    %71 = arith.maximumf %22, %70 : vector<32x80xf32>
    %72 = arith.cmpf oeq, %9, %71 : vector<32x80xf32>
    %cst_27 = arith.constant 0.699999988 : f32
    %73 = vector.broadcast %cst_27 : f32 to vector<32x80xf32>
    %74 = arith.cmpf oge, %9, %73 : vector<32x80xf32>
    %75 = arith.andi %72, %74 : vector<32x80xi1>
    %cst_28 = arith.constant 0.699999988 : f32
    %76 = vector.broadcast %cst_28 : f32 to vector<32x80xf32>
    %77 = arith.cmpf oge, %1, %76 : vector<32x80xf32>
    %78 = arith.andi %75, %77 : vector<32x80xi1>
    %79 = arith.extui %78 : vector<32x80xi1> to vector<32x80xi8>
    %c0_29 = arith.constant 0 : index
    %c0_30 = arith.constant 0 : index
    %80 = vector.load %arg5[%c0_29, %c0_30] : memref<32x80xi8, #tpu.memory_space<vmem>>, vector<32x80xi8>
    tpu.vector_store %arg5[%c0_29, %c0_30], %79 {strides = array<i32>} : memref<32x80xi8, #tpu.memory_space<vmem>>, vector<32x80xi8>,
    return
  }
  func.func @transform_0(%arg0: i32) -> (i32, i32) {
    %c0_i32 = arith.constant 0 : i32
    %c0_i32_0 = arith.constant 0 : i32
    return %arg0, %c0_i32 : i32, i32
  }
  func.func @transform_1(%arg0: i32) -> (i32, i32) {
    %c0_i32 = arith.constant 0 : i32
    %c0_i32_0 = arith.constant 0 : i32
    return %arg0, %c0_i32 : i32, i32
  }
  func.func @transform_2(%arg0: i32) -> (i32, i32) {
    %c4_i32 = arith.constant 4 : i32
    %0 = arith.muli %arg0, %c4_i32 : i32
    %c1_i32 = arith.constant 1 : i32
    %1 = arith.subi %0, %c1_i32 : i32
    %c0_i32 = arith.constant 0 : i32
    %2 = arith.maxsi %1, %c0_i32 : i32
    %c0_i32_0 = arith.constant 0 : i32
    %c0_i32_1 = arith.constant 0 : i32
    return %2, %c0_i32_0 : i32, i32
  }
  func.func @transform_3(%arg0: i32) -> (i32, i32) {
    %c1_i32 = arith.constant 1 : i32
    %0 = arith.addi %arg0, %c1_i32 : i32
    %c4_i32 = arith.constant 4 : i32
    %1 = arith.muli %0, %c4_i32 : i32
    %c11_i32 = arith.constant 11 : i32
    %2 = arith.minsi %1, %c11_i32 : i32
    %c0_i32 = arith.constant 0 : i32
    %c0_i32_0 = arith.constant 0 : i32
    return %2, %c0_i32 : i32, i32
  }
  func.func @transform_4(%arg0: i32) -> (i32, i32) {
    %c0_i32 = arith.constant 0 : i32
    %c0_i32_0 = arith.constant 0 : i32
    return %arg0, %c0_i32 : i32, i32
  }
}

</mosaic_0001>

<llo_original>
// kernel: tpu_custom_call.1
$region0: #{tpu_custom_call.1}
  #allocation0 [shape = 'u32[]', space=smem, size = 0x4, offset = 0x4, fixed_abs, tag = 'smem constant byte address 0x4 - core index']
  #allocation1 [shape = 'u32[144,128]{1,0:T(1,128)}', space=vmem, size = 0x12000, scoped, tag = 'internal scratch']
  %s0 = inlined_call_operand.vmem [shape: f32[96,80], index: 0, kind: input, shape index: {}]
  %s1 = inlined_call_operand.vmem [shape: f32[96,80], index: 1, kind: input, shape index: {}]
  %s2 = inlined_call_operand.vmem [shape: f32[96,80], index: 2, kind: input, shape index: {}]
  %s3 = inlined_call_operand.vmem [shape: f32[96,80], index: 3, kind: input, shape index: {}]
  %s4 = inlined_call_operand.vmem [shape: s8[96,80], index: 4, kind: output, shape index: {}]
  %s5 = sld [smem:[#allocation0]]
  $region49: #{tpu_custom_call.1} parent=0
    _
  %s7 = ssub.s32 1, %s5
  %s8 = scalar_select 0, %s7, %s5
  loop: start=0, step=1, limit=5
  $region2: #{tpu_custom_call.1} parent=0 // loop_pre_header
    _
  $region3: #{tpu_custom_call.1} parent=0 // loop_header
    %s10 = sphi 0, %s14
    %p11 = scmp.ge.s32.totalorder %s10, 5
    %s20 = sphi 0, %s22
    %s23 = sphi 0, %s20
    %s24 = sphi 0, %s23
    %s40 = sphi 0, %s24
    %s46 = sphi 0, %s48
    %s49 = sphi 0, %s46
    %s50 = sphi 0, %s49
    %s66 = sphi 0, %s50
    %s80 = sphi 0, %s82
    %s83 = sphi 0, %s80
    %s84 = sphi 0, %s83
    %s100 = sphi 0, %s84
    %s114 = sphi 0, %s116
    %s117 = sphi 0, %s114
    %s118 = sphi 0, %s117
    %s134 = sphi 0, %s118
    %s140 = sphi 0, %s142
    %s143 = sphi 0, %s140
    %s144 = sphi 0, %s143
    %s160 = sphi 0, %s144
  $region4: #{tpu_custom_call.1} parent=0 // loop_header_branch
    %13 = sbr.rel (%p11) target = $region8
  $region5: #{tpu_custom_call.1} parent=0 // loop_body
    %s15 = ssub.s32 %s10, 1
    %s16 = ssub.s32 %s10, 2
    %s17 = sadd.s32 %s10, 1
    %s18 = ssub.s32 %s10, %s17
    %p19 = scmp.eq.s32.totalorder %s18, 0
    %s21 = sadd.s32 %s20, 1
    %s22 = scalar_select %p19, %s20, %s21
    %p25 = pneg %p19
    %p26 = scmp.eq.s32.totalorder %s10, 2
    %p27 = por %p25, %p26
    %p28 = scmp.ne.s32.totalorder %s20, %s23
    %p29 = scmp.eq.s32.totalorder %s10, 0
    %p30 = por %p28, %p29
    %p31 = scmp.ne.s32.totalorder %s20, %s23
    %p32 = scmp.eq.s32.totalorder %s15, 2
    %p33 = por %p31, %p32
    %p34 = scmp.ne.s32.totalorder %s23, %s24
    %p35 = scmp.eq.s32.totalorder %s15, 0
    %p36 = por %p34, %p35
    %p37 = scmp.ne.s32.totalorder %s23, %s24
    %p38 = scmp.eq.s32.totalorder %s16, 2
    %p39 = por %p37, %p38
    %p41 = scmp.ne.s32.totalorder %s24, %s40
    %p42 = scmp.eq.s32.totalorder %s16, 0
    %p43 = por %p41, %p42
    %s44 = ssub.s32 %s10, %s17
    %p45 = scmp.eq.s32.totalorder %s44, 0
    %s47 = sadd.s32 %s46, 1
    %s48 = scalar_select %p45, %s46, %s47
    %p51 = pneg %p45
    %p52 = scmp.eq.s32.totalorder %s10, 2
    %p53 = por %p51, %p52
    %p54 = scmp.ne.s32.totalorder %s46, %s49
    %p55 = scmp.eq.s32.totalorder %s10, 0
    %p56 = por %p54, %p55
    %p57 = scmp.ne.s32.totalorder %s46, %s49
    %p58 = scmp.eq.s32.totalorder %s15, 2
    %p59 = por %p57, %p58
    %p60 = scmp.ne.s32.totalorder %s49, %s50
    %p61 = scmp.eq.s32.totalorder %s15, 0
    %p62 = por %p60, %p61
    %p63 = scmp.ne.s32.totalorder %s49, %s50
    %p64 = scmp.eq.s32.totalorder %s16, 2
    %p65 = por %p63, %p64
    %p67 = scmp.ne.s32.totalorder %s50, %s66
    %p68 = scmp.eq.s32.totalorder %s16, 0
    %p69 = por %p67, %p68
    %s70 = smul.u32 %s10, 4
    %s71 = ssub.s32 %s70, 1
    %p72 = scmp.gt.s32.totalorder %s71, 0
    %s73 = scalar_select %p72, %s71, 0
    %s74 = smul.u32 %s17, 4
    %s75 = ssub.s32 %s74, 1
    %p76 = scmp.gt.s32.totalorder %s75, 0
    %s77 = scalar_select %p76, %s75, 0
    %s78 = ssub.s32 %s73, %s77
    %p79 = scmp.eq.s32.totalorder %s78, 0
    %s81 = sadd.s32 %s80, 1
    %s82 = scalar_select %p79, %s80, %s81
    %p85 = pneg %p79
    %p86 = scmp.eq.s32.totalorder %s10, 2
    %p87 = por %p85, %p86
    %p88 = scmp.ne.s32.totalorder %s80, %s83
    %p89 = scmp.eq.s32.totalorder %s10, 0
    %p90 = por %p88, %p89
    %p91 = scmp.ne.s32.totalorder %s80, %s83
    %p92 = scmp.eq.s32.totalorder %s15, 2
    %p93 = por %p91, %p92
    %p94 = scmp.ne.s32.totalorder %s83, %s84
    %p95 = scmp.eq.s32.totalorder %s15, 0
    %p96 = por %p94, %p95
    %p97 = scmp.ne.s32.totalorder %s83, %s84
    %p98 = scmp.eq.s32.totalorder %s16, 2
    %p99 = por %p97, %p98
    %p101 = scmp.ne.s32.totalorder %s84, %s100
    %p102 = scmp.eq.s32.totalorder %s16, 0
    %p103 = por %p101, %p102
    %s104 = sadd.s32 %s10, 1
    %s105 = smul.u32 %s104, 4
    %p106 = scmp.lt.s32.totalorder %s105, 11
    %s107 = scalar_select %p106, %s105, 11
    %s108 = sadd.s32 %s17, 1
    %s109 = smul.u32 %s108, 4
    %p110 = scmp.lt.s32.totalorder %s109, 11
    %s111 = scalar_select %p110, %s109, 11
    %s112 = ssub.s32 %s107, %s111
    %p113 = scmp.eq.s32.totalorder %s112, 0
    %s115 = sadd.s32 %s114, 1
    %s116 = scalar_select %p113, %s114, %s115
    %p119 = pneg %p113
    %p120 = scmp.eq.s32.totalorder %s10, 2
    %p121 = por %p119, %p120
    %p122 = scmp.ne.s32.totalorder %s114, %s117
    %p123 = scmp.eq.s32.totalorder %s10, 0
    %p124 = por %p122, %p123
    %p125 = scmp.ne.s32.totalorder %s114, %s117
    %p126 = scmp.eq.s32.totalorder %s15, 2
    %p127 = por %p125, %p126
    %p128 = scmp.ne.s32.totalorder %s117, %s118
    %p129 = scmp.eq.s32.totalorder %s15, 0
    %p130 = por %p128, %p129
    %p131 = scmp.ne.s32.totalorder %s117, %s118
    %p132 = scmp.eq.s32.totalorder %s16, 2
    %p133 = por %p131, %p132
    %p135 = scmp.ne.s32.totalorder %s118, %s134
    %p136 = scmp.eq.s32.totalorder %s16, 0
    %p137 = por %p135, %p136
    %s138 = ssub.s32 %s10, %s17
    %p139 = scmp.eq.s32.totalorder %s138, 0
    %s141 = sadd.s32 %s140, 1
    %s142 = scalar_select %p139, %s140, %s141
    %p145 = pneg %p139
    %p146 = scmp.eq.s32.totalorder %s10, 2
    %p147 = por %p145, %p146
    %p148 = scmp.ne.s32.totalorder %s140, %s143
    %p149 = scmp.eq.s32.totalorder %s10, 0
    %p150 = por %p148, %p149
    %p151 = scmp.ne.s32.totalorder %s140, %s143
    %p152 = scmp.eq.s32.totalorder %s15, 2
    %p153 = por %p151, %p152
    %p154 = scmp.ne.s32.totalorder %s143, %s144
    %p155 = scmp.eq.s32.totalorder %s15, 0
    %p156 = por %p154, %p155
    %p157 = scmp.ne.s32.totalorder %s143, %s144
    %p158 = scmp.eq.s32.totalorder %s16, 2
    %p159 = por %p157, %p158
    %p161 = scmp.ne.s32.totalorder %s144, %s160
    %p162 = scmp.eq.s32.totalorder %s16, 0
    %p163 = por %p161, %p162
    %p164 = scmp.le.s32.totalorder 1, %s10
    %p165 = scmp.lt.s32.totalorder %s10, 4
    %p166 = pnand %p164, %p165
    %p167 = pneg %p166
    // Predicated region
    $region9: #{tpu_custom_call.1} parent=5 // pred_check
      _
    $region10: #{tpu_custom_call.1} parent=5 // pred_check_branch
      %169 = sbr.rel (%p166) target = $region12
    $region11: #{tpu_custom_call.1} parent=5 // pred_region
      %s170 = ssub.s32 %s10, 1
    $region12: #{tpu_custom_call.1} parent=5 // pred_fallthru
      _
    %p171 = scmp.lt.s32.totalorder %s10, 3
    // Predicated region
    $region13: #{tpu_custom_call.1} parent=5 // pred_check
      %p172 = pneg %p171
    $region14: #{tpu_custom_call.1} parent=5 // pred_check_branch
      %174 = sbr.rel (%p172) target = $region16
    $region15: #{tpu_custom_call.1} parent=5 // pred_region
      // Predicated region
      $region17: #{tpu_custom_call.1} parent=15 // pred_check
        %p175 = pneg %p30
      $region18: #{tpu_custom_call.1} parent=15 // pred_check_branch
        %177 = sbr.rel (%p175) target = $region20
      $region19: #{tpu_custom_call.1} parent=15 // pred_region
        %s178 = smul.u32 4, %s10
        %p179 = scmp.lt.s32.totalorder %s178, 11
        %s180 = scalar_select %p179, %s178, 11
        %s181 = smul.addr %s180, 8
        %s182 = scalar_lea.vmem %s0, %s181
        %s183 = smul.u32 4, %s10
      $region20: #{tpu_custom_call.1} parent=15 // pred_fallthru
        _
      // Predicated region
      $region21: #{tpu_custom_call.1} parent=15 // pred_check
        %p184 = pneg %p56
      $region22: #{tpu_custom_call.1} parent=15 // pred_check_branch
        %186 = sbr.rel (%p184) target = $region24
      $region23: #{tpu_custom_call.1} parent=15 // pred_region
        %s187 = smul.u32 4, %s10
        %p188 = scmp.lt.s32.totalorder %s187, 11
        %s189 = scalar_select %p188, %s187, 11
        %s190 = smul.addr %s189, 8
        %s191 = scalar_lea.vmem %s1, %s190
        %s192 = smul.u32 4, %s10
      $region24: #{tpu_custom_call.1} parent=15 // pred_fallthru
        _
      // Predicated region
      $region25: #{tpu_custom_call.1} parent=15 // pred_check
        %p193 = pneg %p90
      $region26: #{tpu_custom_call.1} parent=15 // pred_check_branch
        %195 = sbr.rel (%p193) target = $region28
      $region27: #{tpu_custom_call.1} parent=15 // pred_region
        %s196 = smul.u32 %s10, 4
        %s197 = ssub.s32 %s196, 1
        %p198 = scmp.gt.s32.totalorder %s197, 0
        %s199 = scalar_select %p198, %s197, 0
        %p200 = scmp.lt.s32.totalorder %s199, 11
        %s201 = scalar_select %p200, %s199, 11
        %s202 = smul.addr %s201, 8
        %s203 = scalar_lea.vmem %s2, %s202
        %s204 = smul.u32 %s10, 4
        %s205 = ssub.s32 %s204, 1
        %p206 = scmp.gt.s32.totalorder %s205, 0
        %s207 = scalar_select %p206, %s205, 0
      $region28: #{tpu_custom_call.1} parent=15 // pred_fallthru
        _
      // Predicated region
      $region29: #{tpu_custom_call.1} parent=15 // pred_check
        %p208 = pneg %p124
      $region30: #{tpu_custom_call.1} parent=15 // pred_check_branch
        %210 = sbr.rel (%p208) target = $region32
      $region31: #{tpu_custom_call.1} parent=15 // pred_region
        %s211 = sadd.s32 %s10, 1
        %s212 = smul.u32 %s211, 4
        %p213 = scmp.lt.s32.totalorder %s212, 11
        %s214 = scalar_select %p213, %s212, 11
        %p215 = scmp.lt.s32.totalorder %s214, 11
        %s216 = scalar_select %p215, %s214, 11
        %s217 = smul.addr %s216, 8
        %s218 = scalar_lea.vmem %s3, %s217
        %s219 = sadd.s32 %s10, 1
        %s220 = smul.u32 %s219, 4
        %p221 = scmp.lt.s32.totalorder %s220, 11
        %s222 = scalar_select %p221, %s220, 11
      $region32: #{tpu_custom_call.1} parent=15 // pred_fallthru
        _
    $region16: #{tpu_custom_call.1} parent=5 // pred_fallthru
      _
    %p223 = scmp.le.s32.totalorder 1, %s10
    %p224 = scmp.lt.s32.totalorder %s10, 4
    %p225 = pnand %p223, %p224
    %p226 = pneg %p225
    // Predicated region
    $region33: #{tpu_custom_call.1} parent=5 // pred_check
      _
    $region34: #{tpu_custom_call.1} parent=5 // pred_check_branch
      %228 = sbr.rel (%p225) target = $region36
    $region35: #{tpu_custom_call.1} parent=5 // pred_region
      %s229 = ssub.s32 %s10, 1
      %s230 = smul.u32 4, %s15
      %p231 = scmp.lt.s32.totalorder %s230, 11
      %s232 = scalar_select %p231, %s230, 11
      %s233 = smul.addr %s232, 8
      %s234 = scalar_lea.vmem %s0, %s233
      %p235 = pneg %p36
      %p236 = pneg %p33
      %s237 = smul.u32 4, %s15
      %p238 = scmp.lt.s32.totalorder %s237, 11
      %s239 = scalar_select %p238, %s237, 11
      %s240 = smul.addr %s239, 8
      %s241 = scalar_lea.vmem %s1, %s240
      %p242 = pneg %p62
      %p243 = pneg %p59
      %s244 = smul.u32 %s15, 4
      %s245 = ssub.s32 %s244, 1
      %p246 = scmp.gt.s32.totalorder %s245, 0
      %s247 = scalar_select %p246, %s245, 0
      %p248 = scmp.lt.s32.totalorder %s247, 11
      %s249 = scalar_select %p248, %s247, 11
      %s250 = smul.addr %s249, 8
      %s251 = scalar_lea.vmem %s2, %s250
      %p252 = pneg %p96
      %p253 = pneg %p93
      %s254 = sadd.s32 %s15, 1
      %s255 = smul.u32 %s254, 4
      %p256 = scmp.lt.s32.totalorder %s255, 11
      %s257 = scalar_select %p256, %s255, 11
      %p258 = scmp.lt.s32.totalorder %s257, 11
      %s259 = scalar_select %p258, %s257, 11
      %s260 = smul.addr %s259, 8
      %s261 = scalar_lea.vmem %s3, %s260
      %p262 = pneg %p130
      %p263 = pneg %p127
      %p264 = pneg %p156
      %p265 = pneg %p153
      %s266 = smul.u32 4, %s15
      %p267 = scmp.lt.s32.totalorder %s266, 11
      %s268 = scalar_select %p267, %s266, 11
      %s269 = smul.addr %s268, 2
      %s270 = scalar_lea.vmem %s4, %s269
      %s271 = smul.u32 4, %s15
      %p272 = scmp.lt.s32.totalorder %s271, 11
      %s273 = scalar_select %p272, %s271, 11
      %s274 = smul.addr %s273, 8
      %s275 = scalar_lea.vmem %s0, %s274
      %s276 = smul.u32 4, %s15
      %s277 = smul.u32 4, %s15
      %p278 = scmp.lt.s32.totalorder %s277, 11
      %s279 = scalar_select %p278, %s277, 11
      %s280 = smul.addr %s279, 8
      %s281 = scalar_lea.vmem %s1, %s280
      %s282 = smul.u32 4, %s15
      %s283 = smul.u32 %s15, 4
      %s284 = ssub.s32 %s283, 1
      %p285 = scmp.gt.s32.totalorder %s284, 0
      %s286 = scalar_select %p285, %s284, 0
      %p287 = scmp.lt.s32.totalorder %s286, 11
      %s288 = scalar_select %p287, %s286, 11
      %s289 = smul.addr %s288, 8
      %s290 = scalar_lea.vmem %s2, %s289
      %s291 = smul.u32 %s15, 4
      %s292 = ssub.s32 %s291, 1
      %p293 = scmp.gt.s32.totalorder %s292, 0
      %s294 = scalar_select %p293, %s292, 0
      %s295 = sadd.s32 %s15, 1
      %s296 = smul.u32 %s295, 4
      %p297 = scmp.lt.s32.totalorder %s296, 11
      %s298 = scalar_select %p297, %s296, 11
      %p299 = scmp.lt.s32.totalorder %s298, 11
      %s300 = scalar_select %p299, %s298, 11
      %s301 = smul.addr %s300, 8
      %s302 = scalar_lea.vmem %s3, %s301
      %s303 = sadd.s32 %s15, 1
      %s304 = smul.u32 %s303, 4
      %p305 = scmp.lt.s32.totalorder %s304, 11
      %s306 = scalar_select %p305, %s304, 11
      %s307 = smul.u32 4, %s15
      %p308 = scmp.lt.s32.totalorder %s307, 11
      %s309 = scalar_select %p308, %s307, 11
      %s310 = smul.addr %s309, 2
      %s311 = scalar_lea.vmem %s4, %s310
      %s312 = smul.u32 4, %s15
      %v315 = vld [vmem:[%s281] sm:$0xff]
      %v316 = vld [vmem:[%s281 + $0x8] sm:$0xff]
      %v317 = vld [vmem:[%s281 + $0x10] sm:$0xff]
      %v318 = vld [vmem:[%s281 + $0x18] sm:$0xff]
      %v319 = vld [vmem:[%s275] sm:$0xff]
      %v320 = vld [vmem:[%s275 + $0x8] sm:$0xff]
      %v321 = vld [vmem:[%s275 + $0x10] sm:$0xff]
      %v322 = vld [vmem:[%s275 + $0x18] sm:$0xff]
      %s323 = smul.u32 %s15, 32
      %v324 = vlaneseq
      %v325 = vshrl.u32 %v324, 7
      %v326 = vadd.s32 %v325, 8
      %v327 = vadd.s32 %v325, 16
      %v328 = vadd.s32 %v325, 24
      %v329 = vstv %s323
      %v330 = vadd.s32 %v329, %v325
      %v331 = vadd.s32 %v329, %v326
      %v332 = vadd.s32 %v329, %v327
      %v333 = vadd.s32 %v329, %v328
      %vm334 = vcmp.lt.s32.totalorder %v330, 96
      %vm335 = vcmp.lt.s32.totalorder %v331, 96
      %vm336 = vcmp.lt.s32.totalorder %v332, 96
      %vm337 = vcmp.lt.s32.totalorder %v333, 96
      %v338 = vsel %vm334, %v315, -inf
      %v339 = vsel %vm335, %v316, -inf
      %v340 = vsel %vm336, %v317, -inf
      %v341 = vsel %vm337, %v318, -inf
      %v342 = vlaneseq
      %v343 = vand.u32 %v342, 127
      %vm344 = vcmp.eq.s32.totalorder %v343, 0
      %vm345 = vcmask 1048192
      %346 = vrot.lane.b32.xlu0 %v338, 80
      %v347 = vpop.permute.xlu0 %346
      %v348 = vsel %vm345, %v347, %v338
      %349 = vrot.lane.b32.xlu0 %v339, 80
      %v350 = vpop.permute.xlu0 %349
      %v351 = vsel %vm345, %v350, %v339
      %352 = vrot.lane.b32.xlu0 %v340, 80
      %v353 = vpop.permute.xlu0 %352
      %v354 = vsel %vm345, %v353, %v340
      %355 = vrot.lane.b32.xlu0 %v341, 80
      %v356 = vpop.permute.xlu0 %355
      %v357 = vsel %vm345, %v356, %v341
      %358 = vrot.lane.b32.xlu0 %v348, 80
      %v359 = vpop.permute.xlu0 %358
      %360 = vrot.lane.b32.xlu0 %v351, 80
      %v361 = vpop.permute.xlu0 %360
      %362 = vrot.lane.b32.xlu0 %v354, 80
      %v363 = vpop.permute.xlu0 %362
      %364 = vrot.lane.b32.xlu0 %v357, 80
      %v365 = vpop.permute.xlu0 %364
      %v366 = vsel %vm345, %v359, %v338
      %v367 = vsel %vm345, %v361, %v339
      %v368 = vsel %vm345, %v363, %v340
      %v369 = vsel %vm345, %v365, %v341
      %378 = vrot.lane.b32.xlu0 %v366, 49
      %v379 = vpop.permute.xlu0 %378
      %380 = vrot.lane.b32.xlu0 %v359, 49
      %v381 = vpop.permute.xlu0 %380
      %382 = vrot.lane.b32.xlu0 %v367, 49
      %v383 = vpop.permute.xlu0 %382
      %384 = vrot.lane.b32.xlu0 %v361, 49
      %v385 = vpop.permute.xlu0 %384
      %386 = vrot.lane.b32.xlu0 %v368, 49
      %v387 = vpop.permute.xlu0 %386
      %388 = vrot.lane.b32.xlu0 %v363, 49
      %v389 = vpop.permute.xlu0 %388
      %390 = vrot.lane.b32.xlu0 %v369, 49
      %v391 = vpop.permute.xlu0 %390
      %392 = vrot.lane.b32.xlu0 %v365, 49
      %v393 = vpop.permute.xlu0 %392
      %vm394 = vcmask 400384
      %v395 = vsel %vm394, %v379, %v381
      %v396 = vsel %vm394, %v383, %v385
      %v397 = vsel %vm394, %v387, %v389
      %v398 = vsel %vm394, %v391, %v393
      %v403 = vsel %vm344, -inf, %v395
      %v404 = vsel %vm344, -inf, %v396
      %v405 = vsel %vm344, -inf, %v397
      %v406 = vsel %vm344, -inf, %v398
      %vm407 = vcmp.eq.s32.totalorder %v343, 79
      %408 = vrot.lane.b32.xlu0 %v366, 127
      %v409 = vpop.permute.xlu0 %408
      %410 = vrot.lane.b32.xlu0 %v367, 127
      %v411 = vpop.permute.xlu0 %410
      %412 = vrot.lane.b32.xlu0 %v368, 127
      %v413 = vpop.permute.xlu0 %412
      %414 = vrot.lane.b32.xlu0 %v369, 127
      %v415 = vpop.permute.xlu0 %414
      %v420 = vsel %vm407, -inf, %v409
      %v421 = vsel %vm407, -inf, %v411
      %v422 = vsel %vm407, -inf, %v413
      %v423 = vsel %vm407, -inf, %v415
      %v424 = vmax.f32 %v403, %v420
      %v425 = vmax.f32 %v404, %v421
      %v426 = vmax.f32 %v405, %v422
      %v427 = vmax.f32 %v406, %v423
      %v428 = vmax.f32 %v338, %v424
      %v429 = vmax.f32 %v339, %v425
      %v430 = vmax.f32 %v340, %v426
      %v431 = vmax.f32 %v341, %v427
      %v432 = vld [vmem:[%s290 + $0x7] sm:$0x1]
      %433 = vrot.lane.b32.xlu0 %v432, 80
      %v434 = vpop.permute.xlu0 %433
      %v435 = vsel %vm345, %v434, %v432
      %436 = vrot.lane.b32.xlu0 %v435, 80
      %v437 = vpop.permute.xlu0 %436
      %v438 = vsel %vm345, %v437, %v432
      %441 = vrot.lane.b32.xlu0 %v438, 49
      %v442 = vpop.permute.xlu0 %441
      %443 = vrot.lane.b32.xlu0 %v437, 49
      %v444 = vpop.permute.xlu0 %443
      %v445 = vsel %vm394, %v442, %v444
      %v447 = vsel %vm344, -inf, %v445
      %448 = vrot.lane.b32.xlu0 %v438, 127
      %v449 = vpop.permute.xlu0 %448
      %v451 = vsel %vm407, -inf, %v449
      %v452 = vmax.f32 %v447, %v451
      %v453 = vmax.f32 %v432, %v452
      %v454 = vld [vmem:[%s302] sm:$0x1]
      %455 = vrot.lane.b32.xlu0 %v454, 80
      %v456 = vpop.permute.xlu0 %455
      %v457 = vsel %vm345, %v456, %v454
      %458 = vrot.lane.b32.xlu0 %v457, 80
      %v459 = vpop.permute.xlu0 %458
      %v460 = vsel %vm345, %v459, %v454
      %463 = vrot.lane.b32.xlu0 %v460, 49
      %v464 = vpop.permute.xlu0 %463
      %465 = vrot.lane.b32.xlu0 %v459, 49
      %v466 = vpop.permute.xlu0 %465
      %v467 = vsel %vm394, %v464, %v466
      %v469 = vsel %vm344, -inf, %v467
      %470 = vrot.lane.b32.xlu0 %v460, 127
      %v471 = vpop.permute.xlu0 %470
      %v473 = vsel %vm407, -inf, %v471
      %v474 = vmax.f32 %v469, %v473
      %v475 = vmax.f32 %v454, %v474
      %p476 = scmp.gt.s32.totalorder %s15, 0
      %s477 = scalar_select %p476, 1, 0
      %v478 = vstv %s477
      %vm479 = vcmp.eq.s32.totalorder %v478, 1
      %v480 = vsel %vm479, %v453, -inf
      %p481 = scmp.lt.s32.totalorder %s15, 2
      %s482 = scalar_select %p481, 1, 0
      %v483 = vstv %s482
      %vm484 = vcmp.eq.s32.totalorder %v483, 1
      %v485 = vsel %vm484, %v475, -inf
      %vm486 = vcmp.eq.s32.totalorder %v325, 0
      %vm487 = vcmp.eq.s32.totalorder %v326, 0
      %vm488 = vcmp.eq.s32.totalorder %v327, 0
      %vm489 = vcmp.eq.s32.totalorder %v328, 0
      %v490 = vrot.slane %v428, 7
      %v491 = vrot.slane %v429, 7
      %v492 = vrot.slane %v430, 7
      %v493 = vrot.slane %v431, 7
      %vm494 = vcmp.lt.s32.totalorder %v325, 1
      %v495 = vsel %vm494, %v492, %v493
      %v496 = vsel %vm494, %v491, %v492
      %v497 = vsel %vm494, %v490, %v491
      %v498 = vsel %vm494, %v493, %v490
      %v499 = vlaneseq
      %v500 = vshrl.u32 %v499, 7
      %v501 = vsub.s32 0, %v500
      %v502 = vrot.slane %v480, %v501
      %v503 = vsel %vm486, %v502, %v498
      %v504 = vsel %vm487, %v502, %v497
      %v505 = vsel %vm488, %v502, %v496
      %v506 = vsel %vm489, %v502, %v495
      %vm507 = vcmp.eq.s32.totalorder %v325, 31
      %vm508 = vcmp.eq.s32.totalorder %v326, 31
      %vm509 = vcmp.eq.s32.totalorder %v327, 31
      %vm510 = vcmp.eq.s32.totalorder %v328, 31
      %v511 = vrot.slane %v428, 1
      %v512 = vrot.slane %v429, 1
      %v513 = vrot.slane %v430, 1
      %v514 = vrot.slane %v431, 1
      %vm515 = vcmp.lt.s32.totalorder %v325, 7
      %v516 = vsel %vm515, %v513, %v514
      %v517 = vsel %vm515, %v512, %v513
      %v518 = vsel %vm515, %v511, %v512
      %v519 = vsel %vm515, %v514, %v511
      %v520 = vlaneseq
      %v521 = vshrl.u32 %v520, 7
      %v522 = vsub.s32 0, %v521
      %v523 = vrot.slane %v485, %v522
      %v524 = vsel %vm507, %v523, %v518
      %v525 = vsel %vm508, %v523, %v517
      %v526 = vsel %vm509, %v523, %v516
      %v527 = vsel %vm510, %v523, %v519
      %v528 = vmax.f32 %v503, %v524
      %v529 = vmax.f32 %v504, %v525
      %v530 = vmax.f32 %v505, %v526
      %v531 = vmax.f32 %v506, %v527
      %v532 = vmax.f32 %v428, %v528
      %v533 = vmax.f32 %v429, %v529
      %v534 = vmax.f32 %v430, %v530
      %v535 = vmax.f32 %v431, %v531
      %vm536 = vcmp.eq.f32.partialorder %v338, %v532
      %vm537 = vcmp.eq.f32.partialorder %v339, %v533
      %vm538 = vcmp.eq.f32.partialorder %v340, %v534
      %vm539 = vcmp.eq.f32.partialorder %v341, %v535
      %vm540 = vcmp.ge.f32.partialorder %v338, 0.7
      %vm541 = vcmp.ge.f32.partialorder %v339, 0.7
      %vm542 = vcmp.ge.f32.partialorder %v340, 0.7
      %vm543 = vcmp.ge.f32.partialorder %v341, 0.7
      %vm544 = vmand %vm536, %vm540
      %vm545 = vmand %vm537, %vm541
      %vm546 = vmand %vm538, %vm542
      %vm547 = vmand %vm539, %vm543
      %vm548 = vcmp.ge.f32.partialorder %v319, 0.7
      %vm549 = vcmp.ge.f32.partialorder %v320, 0.7
      %vm550 = vcmp.ge.f32.partialorder %v321, 0.7
      %vm551 = vcmp.ge.f32.partialorder %v322, 0.7
      %vm552 = vmand %vm544, %vm548
      %vm553 = vmand %vm545, %vm549
      %vm554 = vmand %vm546, %vm550
      %vm555 = vmand %vm547, %vm551
      %vm556 = vmpackc.low %vm553, %vm552
      %vm557 = vmpackc.low %vm555, %vm554
      %vm558 = vmpackc.even %vm557, %vm556
      %v559 = vsel %vm558, 16843009, 0
      %v560 = vunpack.c.0.s8 %v559
      %v561 = vunpack.c.1.s8 %v559
      %v562 = vunpack.c.2.s8 %v559
      %v563 = vunpack.c.3.s8 %v559
      %v564 = vpack.c.b16 %v560, %v560
      %v565 = vpack.c.b8 %v564, %v564
      %v566 = vpack.c.b16 %v561, %v561
      %v567 = vpack.c.b8 %v566, %v566
      %v568 = vpack.c.b16 %v562, %v562
      %v569 = vpack.c.b8 %v568, %v568
      %v570 = vpack.c.b16 %v563, %v563
      %v571 = vpack.c.b8 %v570, %v570
      %vm572 = vcmask 648192
      %573 = vst.msk [vmem:[%s311] sm:$0x3] %vm572, %v565
      %574 = vst.msk [vmem:[%s311 + $0x2] sm:$0x3] %vm572, %v567
      %575 = vst.msk [vmem:[%s311 + $0x4] sm:$0x3] %vm572, %v569
      %576 = vst.msk [vmem:[%s311 + $0x6] sm:$0x3] %vm572, %v571
      %s577 = smul.u32 4, %s15
      %p578 = scmp.lt.s32.totalorder %s577, 11
      %s579 = scalar_select %p578, %s577, 11
      %s580 = smul.addr %s579, 2
      %s581 = scalar_lea.vmem %s4, %s580
      // Predicated region
      $region37: #{tpu_custom_call.1} parent=35 // pred_check
        %p582 = pneg %p153
      $region38: #{tpu_custom_call.1} parent=35 // pred_check_branch
        %584 = sbr.rel (%p582) target = $region40
      $region39: #{tpu_custom_call.1} parent=35 // pred_region
        %s585 = smul.u32 4, %s15
      $region40: #{tpu_custom_call.1} parent=35 // pred_fallthru
        _
    $region36: #{tpu_custom_call.1} parent=5 // pred_fallthru
      _
    %p586 = scmp.le.s32.totalorder 2, %s10
    // Predicated region
    $region41: #{tpu_custom_call.1} parent=5 // pred_check
      %p587 = pneg %p586
    $region42: #{tpu_custom_call.1} parent=5 // pred_check_branch
      %589 = sbr.rel (%p587) target = $region44
    $region43: #{tpu_custom_call.1} parent=5 // pred_region
      %s590 = ssub.s32 %s10, 2
      // Predicated region
      $region45: #{tpu_custom_call.1} parent=43 // pred_check
        %p591 = pneg %p159
      $region46: #{tpu_custom_call.1} parent=43 // pred_check_branch
        %593 = sbr.rel (%p591) target = $region48
      $region47: #{tpu_custom_call.1} parent=43 // pred_region
        %s594 = smul.u32 4, %s16
        %p595 = scmp.lt.s32.totalorder %s594, 11
        %s596 = scalar_select %p595, %s594, 11
        %s597 = smul.addr %s596, 2
        %s598 = scalar_lea.vmem %s4, %s597
      $region48: #{tpu_custom_call.1} parent=43 // pred_fallthru
        _
    $region44: #{tpu_custom_call.1} parent=5 // pred_fallthru
      _
  $region6: #{tpu_custom_call.1} parent=0 // loop_footer
    %s14 = sadd.s32 1, %s10
  $region7: #{tpu_custom_call.1} parent=0 // loop_footer_branch
    %9 = sbr.rel target = $region3
  $region8: #{tpu_custom_call.1} parent=0 // loop_exit
    _

</llo_original>
